<compile_context>
chip_gen: v7x
topology: tpu7x:2x2x1
jax: 0.10.0
libtpu: 0.0.40
codegen_flags: <defaults>
</compile_context>

<pallas_src>
import jax
import jax.numpy as jnp
from jax.experimental import pallas as pl
from jax.experimental.pallas import tpu as pltpu
import numpy as np


def _round_up(a, b):
    return (a + b - 1) // b * b


def _shrink(t, align, floor):
    """Halve a tile dim, keeping it a multiple of `align` and >= `floor`."""
    return max(floor, _round_up(t // 2, align))


def _detect_chip():
    try:
        kind = jax.devices()[0].device_kind.lower()
    except Exception:
        kind = ""
    if "v7" in kind or "7x" in kind:
        return "v7x"
    if "v6" in kind:
        return "v6e"
    if "v5" in kind:
        return "v5e"
    return "default"


# Per-generation knobs:
#   vmem_limit : handed to CompilerParams (physical VMEM: 128 MiB v5e/v6e,
#                64 MiB per TensorCore on v7x).
#   budget     : cap on the double-buffered tile footprint.
#   tm/tn      : output-tile targets for the large-M regime (arithmetic
#                intensity tm*tn/(tm+tn) vs. each chip's HBM ridge).
#   tk         : reduction-tile target (big tk = fewer accumulator
#                round-trips through VMEM scratch).
_CHIP_CFG = {
    "v5e":     dict(vmem_limit=96 * 2**20, budget=72 * 2**20, tm=512,  tn=512,  tk=1024),
    "v6e":     dict(vmem_limit=96 * 2**20, budget=72 * 2**20, tm=1024, tn=2048, tk=1024),
    "v7x":     dict(vmem_limit=56 * 2**20, budget=44 * 2**20, tm=1024, tn=2048, tk=1024),
    # Unknown / older chips: conservative (known-good) limit, v6e-like tiles.
    "default": dict(vmem_limit=32 * 2**20, budget=24 * 2**20, tm=512,  tn=1024, tk=512),
}


def _footprint_bytes(tm, tn, tk, in_bytes, out_bytes):
    acc = tm * tn * 4                  # f32 accumulator scratch (single buffer)
    x = 2 * tm * tk * in_bytes         # double-buffered activation tile
    w = 2 * tk * tn * in_bytes         # double-buffered weight tile
    o = 2 * tm * tn * out_bytes        # double-buffered output tile
    b = 2 * tn * 4                     # bias row
    return acc + x + w + o + b


def _pick_tiles(M, N, K, chip, in_bytes, out_bytes):
    cfg = _CHIP_CFG[chip]
    Ma, Na, Ka = _round_up(M, 16), _round_up(N, 128), _round_up(K, 128)

    if M >= 512:
        tm_t, tn_t, tk_t = cfg["tm"], cfg["tn"], cfg["tk"]
        if M < 1024:
            tm_t = min(tm_t, 512)
    else:
        # Decode-like regime: inherently weight-bandwidth bound everywhere.
        # Clamp tm to M, stream the weight once with few, large DMAs.
        tm_t, tn_t, tk_t = 256, cfg["tn"], max(cfg["tk"], 2048)

    tm = min(tm_t, Ma)
    tn = min(tn_t, Na)
    tk = min(tk_t, Ka)

    # Budget the double-buffered footprint.  Shrink tk first: it does not
    # affect arithmetic intensity, only the grid-step count.
    for _ in range(16):
        if _footprint_bytes(tm, tn, tk, in_bytes, out_bytes) <= cfg["budget"]:
            break
        if tk > 512:
            tk = _shrink(tk, 128, 512)
        elif tn > 256:
            tn = _shrink(tn, 128, 256)
        elif tm > 64:
            tm = _shrink(tm, 16, 64)
        elif tk > 128:
            tk = _shrink(tk, 128, 128)
        elif tn > 128:
            tn = _shrink(tn, 128, 128)
        else:
            break

    # v7x has two TensorCores sharing the "parallel" grid axes: make sure
    # there are >= 2 parallel blocks so neither core idles.
    if chip == "v7x":
        for _ in range(8):
            n_par = (_round_up(M, tm) // tm) * (_round_up(N, tn) // tn)
            if n_par >= 2:
                break
            new_tn = _shrink(tn, 128, 128)
            new_tm = _shrink(tm, 16, 16)
            if new_tn < tn:
                tn = new_tn
            elif new_tm < tm:
                tm = new_tm
            else:
                break

    return tm, tn, tk, cfg["vmem_limit"]


def _linear_kernel(x_ref, w_ref, b_ref, o_ref, acc_ref):
    """One (i, j, k) grid step of y = x @ W_kn + bias.

    x_ref  : (tm, tk) activation tile (compute dtype)
    w_ref  : (tk, tn) weight tile, pre-transposed to (in, out) layout
    b_ref  : (1,  tn) f32 bias row (zeros when bias is None)
    o_ref  : (tm, tn) output tile
    acc_ref: (tm, tn) f32 accumulator scratch, resident across the K axis
    """
    k = pl.program_id(2)

    @pl.when(k == 0)
    def _():
        # Fold the bias into the accumulator init: removes a tm*tn f32 add
        # and the bias read from the critical last-K step.
        acc_ref[...] = jnp.broadcast_to(b_ref[...], acc_ref.shape)

    # Plain (m,k)x(k,n) contraction -> MXU with f32 accumulation; the weight
    # was transposed once at prepare time, so no per-step transpose here.
    acc_ref[...] += jnp.dot(x_ref[...], w_ref[...],
                            preferred_element_type=jnp.float32)

    @pl.when(k == pl.num_programs(2) - 1)
    def _():
        o_ref[...] = acc_ref[...].astype(o_ref.dtype)


def prepare_linear_params(weight, bias=None, *, compute_dtype=None):
    """One-time (load-time) parameter preparation -- NOT per forward call.

    * Casts the weight to an explicit, opt-in compute dtype (default: the
      weight's own dtype; pass e.g. jnp.bfloat16 to opt into reduced
      precision when activations are f32 -- never done silently).
    * Transposes PyTorch (out_features, in_features) -> (K, N) so the kernel
      is a standard (m,k)x(k,n) contraction.
    * Prepares the bias as an f32 row.
    Returns (w_kn, bias_row_or_None).
    """
    cd = jnp.dtype(compute_dtype) if compute_dtype is not None else weight.dtype
    w_kn = jnp.asarray(weight, cd).T                     # (K, N)
    b_row = None
    if bias is not None:
        b_row = jnp.asarray(bias, jnp.float32).reshape(1, -1)
    return w_kn, b_row


def origin_float_linear(x, w_kn, bias_row=None, *, out_dtype=None, tiles=None):
    """y = x @ w_kn + bias with (w_kn, bias_row) from prepare_linear_params.

    x: (..., K); w_kn: (K, N); bias_row: (1, N) f32 or None.
    Returns (..., N) in out_dtype (default: x.dtype).
    """
    K, N = w_kn.shape
    orig_shape = x.shape
    assert orig_shape[-1] == K, (orig_shape, w_kn.shape)
    out_dtype = jnp.dtype(out_dtype) if out_dtype is not None else jnp.dtype(x.dtype)

    x2d = x.reshape(-1, K)
    M = x2d.shape[0]

    # Compute dtype was fixed (explicitly) at prepare time; match it here.
    if x2d.dtype != w_kn.dtype:
        x2d = x2d.astype(w_kn.dtype)

    chip = _detect_chip()
    in_bytes = jnp.dtype(w_kn.dtype).itemsize
    out_bytes = out_dtype.itemsize
    if tiles is None:
        tm, tn, tk, vmem_limit = _pick_tiles(M, N, K, chip, in_bytes, out_bytes)
    else:
        tm, tn, tk = tiles
        vmem_limit = _CHIP_CFG[chip]["vmem_limit"]

    Mp, Np, Kp = _round_up(M, tm), _round_up(N, tn), _round_up(K, tk)

    # Pads are skipped (no-op) for aligned production shapes; zero K/N
    # padding contributes nothing to the dot products.
    if (Mp, Kp) != (M, K):
        x2d = jnp.pad(x2d, ((0, Mp - M), (0, Kp - K)))
    w = w_kn
    if (Kp, Np) != (K, N):
        w = jnp.pad(w, ((0, Kp - K), (0, Np - N)))
    if bias_row is None:
        b = jnp.zeros((1, Np), jnp.float32)
    elif Np != N:
        b = jnp.pad(bias_row, ((0, 0), (0, Np - N)))
    else:
        b = bias_row

    grid = (Mp // tm, Np // tn, Kp // tk)

    cost = pl.CostEstimate(
        flops=2 * M * N * K,
        bytes_accessed=(Mp * Kp * in_bytes * (Np // tn)      # x re-reads per N tile
                        + Kp * Np * in_bytes * (Mp // tm)    # w re-reads per M tile
                        + Mp * Np * out_bytes),
        transcendentals=0)

    out = pl.pallas_call(
        _linear_kernel,
        out_shape=jax.ShapeDtypeStruct((Mp, Np), out_dtype),
        grid_spec=pltpu.PrefetchScalarGridSpec(
            num_scalar_prefetch=0,
            grid=grid,
            in_specs=[
                pl.BlockSpec((tm, tk), lambda i, j, k: (i, k)),   # activations
                pl.BlockSpec((tk, tn), lambda i, j, k: (k, j)),   # weight (K, N)
                pl.BlockSpec((1, tn), lambda i, j, k: (0, j)),    # bias row
            ],
            out_specs=pl.BlockSpec((tm, tn), lambda i, j, k: (i, j)),
            scratch_shapes=[pltpu.VMEM((tm, tn), jnp.float32)],
        ),
        compiler_params=pltpu.CompilerParams(
            dimension_semantics=("parallel", "parallel", "arbitrary"),
            vmem_limit_bytes=vmem_limit),
        cost_estimate=cost,
    )(x2d, w, b)

    out = out[:M, :N]
    return out.reshape(*orig_shape[:-1], N)


def origin_float_linear_forward(x, weight, bias=None, **kw):
    """Convenience: full float-path forward from the PyTorch-layout (N, K)
    weight.  Prefer calling prepare_linear_params once at load time."""
    w_kn, b_row = prepare_linear_params(weight, bias)
    return origin_float_linear(x, w_kn, b_row, **kw)


def _reference(x2d, weight, bias):
    y = jnp.dot(x2d.astype(jnp.float32), weight.astype(jnp.float32).T,
                preferred_element_type=jnp.float32)
    if bias is not None:
        y = y + bias.astype(jnp.float32).reshape(1, -1)
    return y


if __name__ == "__main__":
    key = jax.random.PRNGKey(0)
    k_x, k_w, k_b, k_x2, k_w2 = jax.random.split(key, 5)

    batch, seq, in_features, out_features = 2, 8, 192, 320  # ragged on purpose

    x = jax.random.normal(k_x, (batch, seq, in_features),
                          jnp.float32).astype(jnp.bfloat16)
    weight = (0.05 * jax.random.normal(k_w, (out_features, in_features),
                                       jnp.float32)).astype(jnp.bfloat16)
    bias = (0.1 * jax.random.normal(k_b, (out_features,),
                                    jnp.float32)).astype(jnp.bfloat16)

    # One-time (load-time) parameter preparation.
    w_kn, b_row = prepare_linear_params(weight, bias)
    x2d = x.reshape(-1, in_features)

    # With bias.
    y = jax.block_until_ready(origin_float_linear(x, w_kn, b_row))
    y_ref = _reference(x2d, weight, bias).reshape(batch, seq, out_features)
    np.testing.assert_allclose(np.asarray(y, dtype=np.float32),
                               np.asarray(y_ref), rtol=2e-2, atol=2e-2)

    # bias=None path.
    y2 = jax.block_until_ready(origin_float_linear(x, w_kn, None))
    y2_ref = _reference(x2d, weight, None).reshape(batch, seq, out_features)
    np.testing.assert_allclose(np.asarray(y2, dtype=np.float32),
                               np.asarray(y2_ref), rtol=2e-2, atol=2e-2)

    # Lane/sublane-aligned case (exercises the no-padding path).
    M2, K2, N2 = 128, 256, 512
    xa = jax.random.normal(k_x2, (M2, K2), jnp.float32).astype(jnp.bfloat16)
    wa = (0.05 * jax.random.normal(k_w2, (N2, K2), jnp.float32)).astype(jnp.bfloat16)
    wa_kn, _ = prepare_linear_params(wa, None)
    ya = jax.block_until_ready(origin_float_linear(xa, wa_kn, None))
    ya_ref = _reference(xa, wa, None)
    np.testing.assert_allclose(np.asarray(ya, dtype=np.float32),
                               np.asarray(ya_ref), rtol=2e-2, atol=2e-2)

    print("KERNEL_OK")
</pallas_src>

<mosaic_0001>
module attributes {stable_mosaic.version = 11 : i64} {
  func.func @_linear_kernel(%arg0: i32, %arg1: i32, %arg2: i32, %arg3: memref<16x256xbf16, #tpu.memory_space<vmem>>, %arg4: memref<256x384xbf16, #tpu.memory_space<vmem>>, %arg5: memref<1x384xf32, #tpu.memory_space<vmem>>, %arg6: memref<16x384xbf16, #tpu.memory_space<vmem>>, %arg7: memref<16x384xf32, #tpu.memory_space<vmem>>) attributes {dimension_semantics = [#tpu.dimension_semantics<parallel>, #tpu.dimension_semantics<parallel>, #tpu.dimension_semantics<arbitrary>], iteration_bounds = array<i64: 1, 1, 1>, scalar_prefetch = 0 : i64, scratch_operands = 1 : i64, tpu.core_type = #tpu.core_type<tc>, window_params = [{transform_indices = @transform_0, window_bounds = array<i64: 16, 256>}, {transform_indices = @transform_1, window_bounds = array<i64: 256, 384>}, {transform_indices = @transform_2, window_bounds = array<i64: 1, 384>}, {transform_indices = @transform_3, window_bounds = array<i64: 16, 384>}]} {
    %c0_i32 = arith.constant 0 : i32
    %0 = arith.cmpi eq, %arg2, %c0_i32 : i32
    %1 = arith.extui %0 : i1 to i32
    %c0_i32_0 = arith.constant 0 : i32
    %2 = arith.cmpi ne, %1, %c0_i32_0 : i32
    scf.if %2 {
      %c0_10 = arith.constant 0 : index
      %c0_11 = arith.constant 0 : index
      %12 = vector.load %arg5[%c0_10, %c0_11] : memref<1x384xf32, #tpu.memory_space<vmem>>, vector<1x384xf32>
      %13 = vector.shape_cast %12 : vector<1x384xf32> to vector<1x384xf32>
      %14 = vector.broadcast %13 : vector<1x384xf32> to vector<16x384xf32>
      %c0_12 = arith.constant 0 : index
      %c0_13 = arith.constant 0 : index
      %15 = vector.load %arg7[%c0_12, %c0_13] : memref<16x384xf32, #tpu.memory_space<vmem>>, vector<16x384xf32>
      tpu.vector_store %arg7[%c0_12, %c0_13], %14 {strides = array<i32>} : memref<16x384xf32, #tpu.memory_space<vmem>>, vector<16x384xf32>,
    } else {
    }
    %c0 = arith.constant 0 : index
    %c0_1 = arith.constant 0 : index
    %3 = vector.load %arg7[%c0, %c0_1] : memref<16x384xf32, #tpu.memory_space<vmem>>, vector<16x384xf32>
    %c0_2 = arith.constant 0 : index
    %c0_3 = arith.constant 0 : index
    %4 = vector.load %arg3[%c0_2, %c0_3] : memref<16x256xbf16, #tpu.memory_space<vmem>>, vector<16x256xbf16>
    %c0_4 = arith.constant 0 : index
    %c0_5 = arith.constant 0 : index
    %5 = vector.load %arg4[%c0_4, %c0_5] : memref<256x384xbf16, #tpu.memory_space<vmem>>, vector<256x384xbf16>
    %cst = arith.constant dense<0.000000e+00> : vector<16x384xf32>
    %6 = tpu.matmul %4, %5, %cst {dimension_numbers = #tpu.dot_dimension_numbers<[1], [0], [0], [1], [0, 0, 1, 1], [], []>} : vector<16x256xbf16>, vector<256x384xbf16>, vector<16x384xf32> -> vector<16x384xf32>
    %7 = arith.addf %3, %6 : vector<16x384xf32>
    %c0_6 = arith.constant 0 : index
    %c0_7 = arith.constant 0 : index
    %8 = vector.load %arg7[%c0_6, %c0_7] : memref<16x384xf32, #tpu.memory_space<vmem>>, vector<16x384xf32>
    tpu.vector_store %arg7[%c0_6, %c0_7], %7 {strides = array<i32>} : memref<16x384xf32, #tpu.memory_space<vmem>>, vector<16x384xf32>,
    %c0_i32_8 = arith.constant 0 : i32
    %9 = arith.cmpi eq, %arg2, %c0_i32_8 : i32
    %10 = arith.extui %9 : i1 to i32
    %c0_i32_9 = arith.constant 0 : i32
    %11 = arith.cmpi ne, %10, %c0_i32_9 : i32
    scf.if %11 {
      %c0_10 = arith.constant 0 : index
      %c0_11 = arith.constant 0 : index
      %12 = vector.load %arg7[%c0_10, %c0_11] : memref<16x384xf32, #tpu.memory_space<vmem>>, vector<16x384xf32>
      %13 = arith.truncf %12 : vector<16x384xf32> to vector<16x384xbf16>
      %c0_12 = arith.constant 0 : index
      %c0_13 = arith.constant 0 : index
      %14 = vector.load %arg6[%c0_12, %c0_13] : memref<16x384xbf16, #tpu.memory_space<vmem>>, vector<16x384xbf16>
      tpu.vector_store %arg6[%c0_12, %c0_13], %13 {strides = array<i32>} : memref<16x384xbf16, #tpu.memory_space<vmem>>, vector<16x384xbf16>,
    } else {
    }
    return
  }
  func.func @transform_0(%arg0: i32, %arg1: i32, %arg2: i32) -> (i32, i32) {
    %c0_i32 = arith.constant 0 : i32
    return %arg0, %arg2 : i32, i32
  }
  func.func @transform_1(%arg0: i32, %arg1: i32, %arg2: i32) -> (i32, i32) {
    %c0_i32 = arith.constant 0 : i32
    return %arg2, %arg1 : i32, i32
  }
  func.func @transform_2(%arg0: i32, %arg1: i32, %arg2: i32) -> (i32, i32) {
    %c0_i32 = arith.constant 0 : i32
    %c0_i32_0 = arith.constant 0 : i32
    return %c0_i32, %arg1 : i32, i32
  }
  func.func @transform_3(%arg0: i32, %arg1: i32, %arg2: i32) -> (i32, i32) {
    %c0_i32 = arith.constant 0 : i32
    return %arg0, %arg1 : i32, i32
  }
}

</mosaic_0001>

<llo_original>
// kernel: tpu_custom_call.1
$region0: #{tpu_custom_call.1}
  #allocation0 [shape = 'u32[]', space=smem, size = 0x4, offset = 0x4, fixed_abs, tag = 'smem constant byte address 0x4 - core index']
  #allocation1 [shape = 'u32[144,128]{1,0:T(1,128)}', space=vmem, size = 0x12000, scoped, tag = 'internal scratch']
  #allocation2 [shape = 'f32[16,384]{1,0:T(8,128)}', space=vmem, size = 0x6000, scoped, tag = 'scratch operand']
  %s0 = inlined_call_operand.hbm [shape: bf16[16,256], index: 0, kind: input, shape index: {}]
  %s1 = inlined_call_operand.hbm [shape: bf16[256,384], index: 1, kind: input, shape index: {}]
  %s2 = inlined_call_operand.vmem [shape: f32[1,384], index: 2, kind: input, shape index: {}]
  %s3 = inlined_call_operand.hbm [shape: bf16[16,384], index: 3, kind: output, shape index: {}]
  %s4 = sld [smem:[#allocation0]]
  $region38: #{tpu_custom_call.1} parent=0
    _
  %s6 = ssub.s32 1, %s4
  %s7 = scalar_select 0, %s6, %s4
  $region1: #{tpu_custom_call.1} parent=0
    #allocation3 [shape = 'u8[8192]{0}', space=vmem, size = 0x2000, scoped, tag = 'input window, operand 0, single buffered']
    #allocation4 [shape = 's32[1]{0}', space=sflag, size = 0x4, scoped, tag = 'scoped memory for tpu_custom_call.1']
    #allocation5 [shape = 's32[1]{0}', space=sflag, size = 0x4, scoped, tag = 'scoped memory for tpu_custom_call.1']
    #allocation6 [shape = 'u8[196608]{0}', space=vmem, size = 0x30000, scoped, tag = 'input window, operand 1, single buffered']
    #allocation7 [shape = 's32[1]{0}', space=sflag, size = 0x4, scoped, tag = 'scoped memory for tpu_custom_call.1']
    #allocation8 [shape = 'u8[12288]{0}', space=vmem, size = 0x3000, scoped, tag = 'output window, operand 0, single buffered']
    %8 = vsyncpa [#allocation4], 0
    %9 = vsyncpa [#allocation7], 0
    %10 = vsyncpa [#allocation5], 0
    // Predicated region
    $region2: #{tpu_custom_call.1} parent=1 // pred_check
      _
    $region3: #{tpu_custom_call.1} parent=1 // pred_check_branch
      %12 = sbr.rel (0) target = $region5
    $region4: #{tpu_custom_call.1} parent=1 // pred_region
      %s14 = ssub.s32 256, 256
      %15 = vsyncadd [#allocation4], %s14
      %s16 = sshll.u32 [#allocation3], 4
      %s17 = int_to_ptr.vmem [resolvable:$true] %s16
      %22 = dma.hbm_to_vmem [thread:$0]  %s0, 256, %s17, [#allocation4], 128, 128, 8
    $region5: #{tpu_custom_call.1} parent=1 // pred_fallthru
      _
    // Predicated region
    $region6: #{tpu_custom_call.1} parent=1 // pred_check
      _
    $region7: #{tpu_custom_call.1} parent=1 // pred_check_branch
      %24 = sbr.rel (0) target = $region9
    $region8: #{tpu_custom_call.1} parent=1 // pred_region
      %s26 = ssub.s32 6144, 6144
      %27 = vsyncadd [#allocation7], %s26
      %s28 = sshll.u32 [#allocation6], 4
      %s29 = int_to_ptr.vmem [resolvable:$true] %s28
      %34 = dma.hbm_to_vmem [thread:$0]  %s1, 6144, %s29, [#allocation7], 192, 192, 12
    $region9: #{tpu_custom_call.1} parent=1 // pred_fallthru
      _
    // Predicated region
    $region10: #{tpu_custom_call.1} parent=1 // pred_check
      _
    $region11: #{tpu_custom_call.1} parent=1 // pred_check_branch
      %36 = sbr.rel (0) target = $region13
    $region12: #{tpu_custom_call.1} parent=1 // pred_region
      _
    $region13: #{tpu_custom_call.1} parent=1 // pred_fallthru
      _
    // Predicated region
    $region14: #{tpu_custom_call.1} parent=1 // pred_check
      _
    $region15: #{tpu_custom_call.1} parent=1 // pred_check_branch
      %38 = sbr.rel (0) target = $region17
    $region16: #{tpu_custom_call.1} parent=1 // pred_region
      %39 = dma.done [#allocation4], 256
    $region17: #{tpu_custom_call.1} parent=1 // pred_fallthru
      _
    // Predicated region
    $region18: #{tpu_custom_call.1} parent=1 // pred_check
      _
    $region19: #{tpu_custom_call.1} parent=1 // pred_check_branch
      %41 = sbr.rel (0) target = $region21
    $region20: #{tpu_custom_call.1} parent=1 // pred_region
      %42 = dma.done [#allocation7], 6144
    $region21: #{tpu_custom_call.1} parent=1 // pred_fallthru
      _
    %p44 = scmp.eq.s32.totalorder 0, 0
    // Predicated region
    $region22: #{tpu_custom_call.1} parent=1 // pred_check
      %p45 = pneg %p44
    $region23: #{tpu_custom_call.1} parent=1 // pred_check_branch
      %47 = sbr.rel (%p45) target = $region25
    $region24: #{tpu_custom_call.1} parent=1 // pred_region
      %v48 = vld [vmem:[%s2] sm:$0x7]
      %v50 = vlaneseq
      %v51 = vshrl.u32 %v50, 7
      %v52 = vsub.s32 0, %v51
      %v53 = vrot.slane %v48, %v52
      %v54 = vlaneseq
      %v55 = vshrl.u32 %v54, 7
      %v56 = vsub.s32 1, %v55
      %v57 = vrot.slane %v48, %v56
      %v58 = vlaneseq
      %v59 = vshrl.u32 %v58, 7
      %v60 = vsub.s32 2, %v59
      %v61 = vrot.slane %v48, %v60
      %65 = vst [vmem:[#allocation2] sm:$0xff] %v53
      %66 = vst [vmem:[#allocation2 + $0x8] sm:$0xff] %v57
      %67 = vst [vmem:[#allocation2 + $0x10] sm:$0xff] %v61
      %68 = vst [vmem:[#allocation2 + $0x18] sm:$0xff] %v53
      %69 = vst [vmem:[#allocation2 + $0x20] sm:$0xff] %v57
      %70 = vst [vmem:[#allocation2 + $0x28] sm:$0xff] %v61
    $region25: #{tpu_custom_call.1} parent=1 // pred_fallthru
      _
    %v71 = vld [vmem:[#allocation2] sm:$0xff]
    %v72 = vld [vmem:[#allocation2 + $0x8] sm:$0xff]
    %v73 = vld [vmem:[#allocation2 + $0x10] sm:$0xff]
    %v74 = vld [vmem:[#allocation2 + $0x18] sm:$0xff]
    %v75 = vld [vmem:[#allocation2 + $0x20] sm:$0xff]
    %v76 = vld [vmem:[#allocation2 + $0x28] sm:$0xff]
    %v77 = vld [vmem:[#allocation3] sm:$0xff]
    %v78 = vld [vmem:[#allocation3 + $0x8] sm:$0xff]
    %v79 = vld [vmem:[#allocation6] sm:$0xff]
    %v80 = vld [vmem:[#allocation6 + $0x8] sm:$0xf]
    %v81 = vld [vmem:[#allocation6 + $0xc] sm:$0xff]
    %v82 = vld [vmem:[#allocation6 + $0x14] sm:$0xf]
    %v83 = vld [vmem:[#allocation6 + $0x18] sm:$0xff]
    %v84 = vld [vmem:[#allocation6 + $0x20] sm:$0xf]
    %v85 = vld [vmem:[#allocation6 + $0x24] sm:$0xff]
    %v86 = vld [vmem:[#allocation6 + $0x2c] sm:$0xf]
    %v87 = vld [vmem:[#allocation6 + $0x30] sm:$0xff]
    %v88 = vld [vmem:[#allocation6 + $0x38] sm:$0xf]
    %v89 = vld [vmem:[#allocation6 + $0x3c] sm:$0xff]
    %v90 = vld [vmem:[#allocation6 + $0x44] sm:$0xf]
    %v91 = vld [vmem:[#allocation6 + $0x48] sm:$0xff]
    %v92 = vld [vmem:[#allocation6 + $0x50] sm:$0xf]
    %v93 = vld [vmem:[#allocation6 + $0x54] sm:$0xff]
    %v94 = vld [vmem:[#allocation6 + $0x5c] sm:$0xf]
    %v95 = vld [vmem:[#allocation6 + $0x60] sm:$0xff]
    %v96 = vld [vmem:[#allocation6 + $0x68] sm:$0xf]
    %v97 = vld [vmem:[#allocation6 + $0x6c] sm:$0xff]
    %v98 = vld [vmem:[#allocation6 + $0x74] sm:$0xf]
    %v99 = vld [vmem:[#allocation6 + $0x78] sm:$0xff]
    %v100 = vld [vmem:[#allocation6 + $0x80] sm:$0xf]
    %v101 = vld [vmem:[#allocation6 + $0x84] sm:$0xff]
    %v102 = vld [vmem:[#allocation6 + $0x8c] sm:$0xf]
    %v103 = vld [vmem:[#allocation6 + $0x90] sm:$0xff]
    %v104 = vld [vmem:[#allocation6 + $0x98] sm:$0xf]
    %v105 = vld [vmem:[#allocation6 + $0x9c] sm:$0xff]
    %v106 = vld [vmem:[#allocation6 + $0xa4] sm:$0xf]
    %v107 = vld [vmem:[#allocation6 + $0xa8] sm:$0xff]
    %v108 = vld [vmem:[#allocation6 + $0xb0] sm:$0xf]
    %v109 = vld [vmem:[#allocation6 + $0xb4] sm:$0xff]
    %v110 = vld [vmem:[#allocation6 + $0xbc] sm:$0xf]
    %v111 = vld [vmem:[#allocation6 + $0xc0] sm:$0xff]
    %v112 = vld [vmem:[#allocation6 + $0xc8] sm:$0xf]
    %v113 = vld [vmem:[#allocation6 + $0xcc] sm:$0xff]
    %v114 = vld [vmem:[#allocation6 + $0xd4] sm:$0xf]
    %v115 = vld [vmem:[#allocation6 + $0xd8] sm:$0xff]
    %v116 = vld [vmem:[#allocation6 + $0xe0] sm:$0xf]
    %v117 = vld [vmem:[#allocation6 + $0xe4] sm:$0xff]
    %v118 = vld [vmem:[#allocation6 + $0xec] sm:$0xf]
    %v119 = vld [vmem:[#allocation6 + $0xf0] sm:$0xff]
    %v120 = vld [vmem:[#allocation6 + $0xf8] sm:$0xf]
    %v121 = vld [vmem:[#allocation6 + $0xfc] sm:$0xff]
    %v122 = vld [vmem:[#allocation6 + $0x104] sm:$0xf]
    %v123 = vld [vmem:[#allocation6 + $0x108] sm:$0xff]
    %v124 = vld [vmem:[#allocation6 + $0x110] sm:$0xf]
    %v125 = vld [vmem:[#allocation6 + $0x114] sm:$0xff]
    %v126 = vld [vmem:[#allocation6 + $0x11c] sm:$0xf]
    %v127 = vld [vmem:[#allocation6 + $0x120] sm:$0xff]
    %v128 = vld [vmem:[#allocation6 + $0x128] sm:$0xf]
    %v129 = vld [vmem:[#allocation6 + $0x12c] sm:$0xff]
    %v130 = vld [vmem:[#allocation6 + $0x134] sm:$0xf]
    %v131 = vld [vmem:[#allocation6 + $0x138] sm:$0xff]
    %v132 = vld [vmem:[#allocation6 + $0x140] sm:$0xf]
    %v133 = vld [vmem:[#allocation6 + $0x144] sm:$0xff]
    %v134 = vld [vmem:[#allocation6 + $0x14c] sm:$0xf]
    %v135 = vld [vmem:[#allocation6 + $0x150] sm:$0xff]
    %v136 = vld [vmem:[#allocation6 + $0x158] sm:$0xf]
    %v137 = vld [vmem:[#allocation6 + $0x15c] sm:$0xff]
    %v138 = vld [vmem:[#allocation6 + $0x164] sm:$0xf]
    %v139 = vld [vmem:[#allocation6 + $0x168] sm:$0xff]
    %v140 = vld [vmem:[#allocation6 + $0x170] sm:$0xf]
    %v141 = vld [vmem:[#allocation6 + $0x174] sm:$0xff]
    %v142 = vld [vmem:[#allocation6 + $0x17c] sm:$0xf]
    %v145 = vunpack.c.l.b16 %v77
    %v146 = vunpack.c.h.b16 %v77
    %v147 = vunpack.c.l.b16 %v78
    %v148 = vunpack.c.h.b16 %v78
    %v149 = vpack.c.b16 %v147, %v145
    %v150 = vpack.c.b16 %v148, %v146
    %v217 = vunpack.c.l.b16 %v79
    %v218 = vunpack.c.h.b16 %v79
    %v219 = vunpack.c.l.b16 %v80
    %v220 = vunpack.c.l.b16 %v81
    %v221 = vunpack.c.h.b16 %v81
    %v222 = vunpack.c.l.b16 %v82
    %v223 = vunpack.c.l.b16 %v83
    %v224 = vunpack.c.h.b16 %v83
    %v225 = vunpack.c.l.b16 %v84
    %v226 = vunpack.c.l.b16 %v85
    %v227 = vunpack.c.h.b16 %v85
    %v228 = vunpack.c.l.b16 %v86
    %v229 = vunpack.c.l.b16 %v87
    %v230 = vunpack.c.h.b16 %v87
    %v231 = vunpack.c.l.b16 %v88
    %v232 = vunpack.c.l.b16 %v89
    %v233 = vunpack.c.h.b16 %v89
    %v234 = vunpack.c.l.b16 %v90
    %v235 = vunpack.c.l.b16 %v91
    %v236 = vunpack.c.h.b16 %v91
    %v237 = vunpack.c.l.b16 %v92
    %v238 = vunpack.c.l.b16 %v93
    %v239 = vunpack.c.h.b16 %v93
    %v240 = vunpack.c.l.b16 %v94
    %v241 = vunpack.c.l.b16 %v95
    %v242 = vunpack.c.h.b16 %v95
    %v243 = vunpack.c.l.b16 %v96
    %v244 = vunpack.c.l.b16 %v97
    %v245 = vunpack.c.h.b16 %v97
    %v246 = vunpack.c.l.b16 %v98
    %v247 = vunpack.c.l.b16 %v99
    %v248 = vunpack.c.h.b16 %v99
    %v249 = vunpack.c.l.b16 %v100
    %v250 = vunpack.c.l.b16 %v101
    %v251 = vunpack.c.h.b16 %v101
    %v252 = vunpack.c.l.b16 %v102
    %v253 = vunpack.c.l.b16 %v103
    %v254 = vunpack.c.h.b16 %v103
    %v255 = vunpack.c.l.b16 %v104
    %v256 = vunpack.c.l.b16 %v105
    %v257 = vunpack.c.h.b16 %v105
    %v258 = vunpack.c.l.b16 %v106
    %v259 = vunpack.c.l.b16 %v107
    %v260 = vunpack.c.h.b16 %v107
    %v261 = vunpack.c.l.b16 %v108
    %v262 = vunpack.c.l.b16 %v109
    %v263 = vunpack.c.h.b16 %v109
    %v264 = vunpack.c.l.b16 %v110
    %v265 = vunpack.c.l.b16 %v111
    %v266 = vunpack.c.h.b16 %v111
    %v267 = vunpack.c.l.b16 %v112
    %v268 = vunpack.c.l.b16 %v113
    %v269 = vunpack.c.h.b16 %v113
    %v270 = vunpack.c.l.b16 %v114
    %v271 = vunpack.c.l.b16 %v115
    %v272 = vunpack.c.h.b16 %v115
    %v273 = vunpack.c.l.b16 %v116
    %v274 = vunpack.c.l.b16 %v117
    %v275 = vunpack.c.h.b16 %v117
    %v276 = vunpack.c.l.b16 %v118
    %v277 = vunpack.c.l.b16 %v119
    %v278 = vunpack.c.h.b16 %v119
    %v279 = vunpack.c.l.b16 %v120
    %v280 = vunpack.c.l.b16 %v121
    %v281 = vunpack.c.h.b16 %v121
    %v282 = vunpack.c.l.b16 %v122
    %v283 = vunpack.c.l.b16 %v123
    %v284 = vunpack.c.h.b16 %v123
    %v285 = vunpack.c.l.b16 %v124
    %v286 = vunpack.c.l.b16 %v125
    %v287 = vunpack.c.h.b16 %v125
    %v288 = vunpack.c.l.b16 %v126
    %v289 = vunpack.c.l.b16 %v127
    %v290 = vunpack.c.h.b16 %v127
    %v291 = vunpack.c.l.b16 %v128
    %v292 = vunpack.c.l.b16 %v129
    %v293 = vunpack.c.h.b16 %v129
    %v294 = vunpack.c.l.b16 %v130
    %v295 = vunpack.c.l.b16 %v131
    %v296 = vunpack.c.h.b16 %v131
    %v297 = vunpack.c.l.b16 %v132
    %v298 = vunpack.c.l.b16 %v133
    %v299 = vunpack.c.h.b16 %v133
    %v300 = vunpack.c.l.b16 %v134
    %v301 = vunpack.c.l.b16 %v135
    %v302 = vunpack.c.h.b16 %v135
    %v303 = vunpack.c.l.b16 %v136
    %v304 = vunpack.c.l.b16 %v137
    %v305 = vunpack.c.h.b16 %v137
    %v306 = vunpack.c.l.b16 %v138
    %v307 = vunpack.c.l.b16 %v139
    %v308 = vunpack.c.h.b16 %v139
    %v309 = vunpack.c.l.b16 %v140
    %v310 = vunpack.c.l.b16 %v141
    %v311 = vunpack.c.h.b16 %v141
    %v312 = vunpack.c.l.b16 %v142
    %v313 = vpack.c.b16 %v220, %v217
    %v314 = vpack.c.b16 %v221, %v218
    %v315 = vpack.c.b16 %v222, %v219
    %v316 = vpack.c.b16 %v226, %v223
    %v317 = vpack.c.b16 %v227, %v224
    %v318 = vpack.c.b16 %v228, %v225
    %v319 = vpack.c.b16 %v232, %v229
    %v320 = vpack.c.b16 %v233, %v230
    %v321 = vpack.c.b16 %v234, %v231
    %v322 = vpack.c.b16 %v238, %v235
    %v323 = vpack.c.b16 %v239, %v236
    %v324 = vpack.c.b16 %v240, %v237
    %v325 = vpack.c.b16 %v244, %v241
    %v326 = vpack.c.b16 %v245, %v242
    %v327 = vpack.c.b16 %v246, %v243
    %v328 = vpack.c.b16 %v250, %v247
    %v329 = vpack.c.b16 %v251, %v248
    %v330 = vpack.c.b16 %v252, %v249
    %v331 = vpack.c.b16 %v256, %v253
    %v332 = vpack.c.b16 %v257, %v254
    %v333 = vpack.c.b16 %v258, %v255
    %v334 = vpack.c.b16 %v262, %v259
    %v335 = vpack.c.b16 %v263, %v260
    %v336 = vpack.c.b16 %v264, %v261
    %v337 = vpack.c.b16 %v268, %v265
    %v338 = vpack.c.b16 %v269, %v266
    %v339 = vpack.c.b16 %v270, %v267
    %v340 = vpack.c.b16 %v274, %v271
    %v341 = vpack.c.b16 %v275, %v272
    %v342 = vpack.c.b16 %v276, %v273
    %v343 = vpack.c.b16 %v280, %v277
    %v344 = vpack.c.b16 %v281, %v278
    %v345 = vpack.c.b16 %v282, %v279
    %v346 = vpack.c.b16 %v286, %v283
    %v347 = vpack.c.b16 %v287, %v284
    %v348 = vpack.c.b16 %v288, %v285
    %v349 = vpack.c.b16 %v292, %v289
    %v350 = vpack.c.b16 %v293, %v290
    %v351 = vpack.c.b16 %v294, %v291
    %v352 = vpack.c.b16 %v298, %v295
    %v353 = vpack.c.b16 %v299, %v296
    %v354 = vpack.c.b16 %v300, %v297
    %v355 = vpack.c.b16 %v304, %v301
    %v356 = vpack.c.b16 %v305, %v302
    %v357 = vpack.c.b16 %v306, %v303
    %v358 = vpack.c.b16 %v310, %v307
    %v359 = vpack.c.b16 %v311, %v308
    %v360 = vpack.c.b16 %v312, %v309
    %409 = vmatprep.subr.bf16.mxu0 %v314
    %410 = vmatpush1.bf16.msra.mxu0 %v313
    %411 = vmatprep.subr.bf16.mxu0 %v317
    %412 = vmatpush1.bf16.msra.mxu0 %v316
    %413 = vmatprep.subr.bf16.mxu0 %v320
    %414 = vmatpush1.bf16.msra.mxu0 %v319
    %415 = vmatprep.subr.bf16.mxu0 %v323
    %416 = vmatpush1.bf16.msra.mxu0 %v322
    %417 = vmatprep.subr.bf16.mxu0 %v326
    %418 = vmatpush1.bf16.msra.mxu0 %v325
    %419 = vmatprep.subr.bf16.mxu0 %v329
    %420 = vmatpush1.bf16.msra.mxu0 %v328
    %421 = vmatprep.subr.bf16.mxu0 %v332
    %422 = vmatpush1.bf16.msra.mxu0 %v331
    %423 = vmatprep.subr.bf16.mxu0 %v335
    %424 = vmatpush1.bf16.msra.mxu0 %v334
    %425 = vmatprep.subr.bf16.mxu0 %v338
    %426 = vmatpush1.bf16.msra.mxu0 %v337
    %427 = vmatprep.subr.bf16.mxu0 %v341
    %428 = vmatpush1.bf16.msra.mxu0 %v340
    %429 = vmatprep.subr.bf16.mxu0 %v344
    %430 = vmatpush1.bf16.msra.mxu0 %v343
    %431 = vmatprep.subr.bf16.mxu0 %v347
    %432 = vmatpush1.bf16.msra.mxu0 %v346
    %433 = vmatprep.subr.bf16.mxu0 %v350
    %434 = vmatpush1.bf16.msra.mxu0 %v349
    %435 = vmatprep.subr.bf16.mxu0 %v353
    %436 = vmatpush1.bf16.msra.mxu0 %v352
    %437 = vmatprep.subr.bf16.mxu0 %v356
    %438 = vmatpush1.bf16.msra.mxu0 %v355
    %439 = vmatprep.subr.bf16.mxu0 %v359
    %440 = vmatpush1.bf16.msra.mxu0 %v358
    %441 = vmatprep.mubr.bf16.mxu0 %v150
    %442 = vmatmul.mubr.bf16.gmra.mrb[0].mxu0 %v149
    %v443 = vpop.f32.mrb[0].mxu0
    %v444 = vadd.f32 0.0, %v443
    %v445 = vpop.f32.mrb[0].mxu0
    %v446 = vadd.f32 0.0, %v445
    %v447 = vpop.f32.mrb[0].mxu0
    %v448 = vadd.f32 0.0, %v447
    %v449 = vpop.f32.mrb[0].mxu0
    %v450 = vadd.f32 0.0, %v449
    %451 = vdwg.mxu0
    %452 = vmatprep.subr.bf16.mxu0 0
    %453 = vmatpush1.bf16.msra.mxu0 %v315
    %454 = vmatprep.subr.bf16.mxu0 0
    %455 = vmatpush1.bf16.msra.mxu0 %v318
    %456 = vmatprep.subr.bf16.mxu0 0
    %457 = vmatpush1.bf16.msra.mxu0 %v321
    %458 = vmatprep.subr.bf16.mxu0 0
    %459 = vmatpush1.bf16.msra.mxu0 %v324
    %460 = vmatprep.subr.bf16.mxu0 0
    %461 = vmatpush1.bf16.msra.mxu0 %v327
    %462 = vmatprep.subr.bf16.mxu0 0
    %463 = vmatpush1.bf16.msra.mxu0 %v330
    %464 = vmatprep.subr.bf16.mxu0 0
    %465 = vmatpush1.bf16.msra.mxu0 %v333
    %466 = vmatprep.subr.bf16.mxu0 0
    %467 = vmatpush1.bf16.msra.mxu0 %v336
    %468 = vmatprep.subr.bf16.mxu0 0
    %469 = vmatpush1.bf16.msra.mxu0 %v339
    %470 = vmatprep.subr.bf16.mxu0 0
    %471 = vmatpush1.bf16.msra.mxu0 %v342
    %472 = vmatprep.subr.bf16.mxu0 0
    %473 = vmatpush1.bf16.msra.mxu0 %v345
    %474 = vmatprep.subr.bf16.mxu0 0
    %475 = vmatpush1.bf16.msra.mxu0 %v348
    %476 = vmatprep.subr.bf16.mxu0 0
    %477 = vmatpush1.bf16.msra.mxu0 %v351
    %478 = vmatprep.subr.bf16.mxu0 0
    %479 = vmatpush1.bf16.msra.mxu0 %v354
    %480 = vmatprep.subr.bf16.mxu0 0
    %481 = vmatpush1.bf16.msra.mxu0 %v357
    %482 = vmatprep.subr.bf16.mxu0 0
    %483 = vmatpush1.bf16.msra.mxu0 %v360
    %484 = vmatprep.mubr.bf16.mxu0 %v150
    %485 = vmatmul.mubr.bf16.gmra.mrb[0].mxu0 %v149
    %v486 = vpop.f32.mrb[0].mxu0
    %v487 = vadd.f32 0.0, %v486
    %v488 = vpop.f32.mrb[0].mxu0
    %v489 = vpop.f32.mrb[0].mxu0
    %v490 = vadd.f32 0.0, %v489
    %v491 = vpop.f32.mrb[0].mxu0
    %492 = vdwg.mxu0
    %v493 = vadd.f32 %v71, %v444
    %v494 = vadd.f32 %v72, %v446
    %v495 = vadd.f32 %v73, %v487
    %v496 = vadd.f32 %v74, %v448
    %v497 = vadd.f32 %v75, %v450
    %v498 = vadd.f32 %v76, %v490
    %499 = vst [vmem:[#allocation2] sm:$0xff] %v493
    %500 = vst [vmem:[#allocation2 + $0x8] sm:$0xff] %v494
    %501 = vst [vmem:[#allocation2 + $0x10] sm:$0xff] %v495
    %502 = vst [vmem:[#allocation2 + $0x18] sm:$0xff] %v496
    %503 = vst [vmem:[#allocation2 + $0x20] sm:$0xff] %v497
    %504 = vst [vmem:[#allocation2 + $0x28] sm:$0xff] %v498
    // Predicated region
    $region26: #{tpu_custom_call.1} parent=1 // pred_check
      %p505 = pneg %p44
    $region27: #{tpu_custom_call.1} parent=1 // pred_check_branch
      %507 = sbr.rel (%p505) target = $region29
    $region28: #{tpu_custom_call.1} parent=1 // pred_region
      %v508 = vld [vmem:[#allocation2] sm:$0xff]
      %v509 = vld [vmem:[#allocation2 + $0x8] sm:$0xff]
      %v510 = vld [vmem:[#allocation2 + $0x10] sm:$0xff]
      %v511 = vld [vmem:[#allocation2 + $0x18] sm:$0xff]
      %v512 = vld [vmem:[#allocation2 + $0x20] sm:$0xff]
      %v513 = vld [vmem:[#allocation2 + $0x28] sm:$0xff]
      %v514 = vpack.c.bf16 %v511, %v508
      %v515 = vpack.c.bf16 %v512, %v509
      %v516 = vpack.c.bf16 %v513, %v510
      %v520 = vunpack.c.l.b16 %v514
      %v521 = vunpack.c.l.b16 %v515
      %v522 = vunpack.c.l.b16 %v516
      %v523 = vunpack.c.h.b16 %v514
      %v524 = vunpack.c.h.b16 %v515
      %v525 = vunpack.c.h.b16 %v516
      %v526 = vpack.c.b16 %v521, %v520
      %v527 = vpack.c.b16 %v522, %v522
      %v528 = vpack.c.b16 %v524, %v523
      %v529 = vpack.c.b16 %v525, %v525
      %534 = vst [vmem:[#allocation8] sm:$0xff] %v526
      %535 = vst [vmem:[#allocation8 + $0x8] sm:$0xf] %v527
      %536 = vst [vmem:[#allocation8 + $0xc] sm:$0xff] %v528
      %537 = vst [vmem:[#allocation8 + $0x14] sm:$0xf] %v529
    $region29: #{tpu_custom_call.1} parent=1 // pred_fallthru
      _
    // Predicated region
    $region30: #{tpu_custom_call.1} parent=1 // pred_check
      _
    $region31: #{tpu_custom_call.1} parent=1 // pred_check_branch
      %539 = sbr.rel (0) target = $region33
    $region32: #{tpu_custom_call.1} parent=1 // pred_region
      %s541 = ssub.s32 384, 384
      %542 = vsyncadd [#allocation5], %s541
      %s543 = sshll.u32 [#allocation8], 4
      %s544 = int_to_ptr.vmem [resolvable:$true] %s543
      %549 = dma.vmem_to_hbm [thread:$0]  %s544, 384, %s3, [#allocation5], 192, 192, 12
    $region33: #{tpu_custom_call.1} parent=1 // pred_fallthru
      _
    // Predicated region
    $region34: #{tpu_custom_call.1} parent=1 // pred_check
      _
    $region35: #{tpu_custom_call.1} parent=1 // pred_check_branch
      %551 = sbr.rel (0) target = $region37
    $region36: #{tpu_custom_call.1} parent=1 // pred_region
      %552 = dma.done [#allocation5], 384
    $region37: #{tpu_custom_call.1} parent=1 // pred_fallthru
      _
    %553 = vsyncpa [#allocation4], 1
    %554 = vsyncpa [#allocation7], 1
    %555 = vsyncpa [#allocation5], 1

</llo_original>
